<compile_context>
chip_gen: v7x
topology: tpu7x:2x2x1
jax: 0.10.0
libtpu: 0.0.40
codegen_flags: <defaults>
</compile_context>

<pallas_src>
import itertools

import jax
import jax.numpy as jnp
import numpy as np
from jax.experimental import pallas as pl
from jax.experimental.pallas import tpu as pltpu

try:  # Hungarian assignment, same algorithm the torch module relies on.
    from scipy.optimize import linear_sum_assignment as _scipy_lsa
except Exception:  # pragma: no cover - scipy not installed
    _scipy_lsa = None


# ---------------------------------------------------------------------------
# Pallas kernel: CE cost matrix  cost[g, i, j] = lse(p[g, i]) - p[g, i, t[g, j]]
# ---------------------------------------------------------------------------
def _cost_matrix_kernel(preds_ref, tgt_ref, cost_ref):
    """preds_ref: (G, TR, D) logits (any float dtype, upcast to f32 in VMEM)
       tgt_ref  : (G, 1, Np) int32 class ids (num on the lane axis)
       cost_ref : (G, TR, Np) f32 cost tile
    """
    p = preds_ref[...].astype(jnp.float32)                       # (G, TR, D)
    tgt = tgt_ref[...]                                           # (G, 1, Np)
    g, _, d = p.shape
    n_pad = tgt.shape[-1]

    # Stable logsumexp over the class axis (per prediction row).
    m = jnp.max(p, axis=-1, keepdims=True)                       # (G, TR, 1)
    lse = m + jnp.log(jnp.sum(jnp.exp(p - m), axis=-1, keepdims=True))

    # One-hot built in-register, already transposed:
    #   oh_t[g, c, j] = (c == tgt[g, j])   -- pure VPU compare, no HBM traffic.
    iota_c = jax.lax.broadcasted_iota(jnp.int32, (g, d, n_pad), 1)
    oh_t = (iota_c == tgt).astype(jnp.float32)                   # (G, D, Np)

    # gathered[g, i, j] = p[g, i, tgt[g, j]] -- batched NN matmul on the MXU
    # (contracts p's class dim with oh_t's first non-batch dim; no transpose).
    gathered = jax.lax.dot_general(
        p, oh_t,
        dimension_numbers=(((2,), (1,)), ((0,), (0,))),
        preferred_element_type=jnp.float32)                      # (G, TR, Np)

    cost_ref[...] = lse - gathered


# ---------------------------------------------------------------------------
# Tiling helpers + pallas_call wrapper
# ---------------------------------------------------------------------------
def _round_up(x, m):
    return ((x + m - 1) // m) * m


def _vmem_footprint_bytes(g, tile_r, num_pad, dim, pred_itemsize):
    preds_blk = g * tile_r * dim * pred_itemsize
    tgt_blk = g * num_pad * 4
    out_blk = g * tile_r * num_pad * 4
    return 2 * (preds_blk + tgt_blk + out_blk)        # x2: double-buffered streams


def _choose_tiling(batch, num_pad, dim, pred_itemsize, budget=12 * 1024 * 1024):
    # Largest divisor of batch whose full-row block fits the VMEM budget
    # (amortizes per-grid-step overhead; at toy sizes this collapses the grid).
    g = batch
    while g > 1 and (batch % g != 0 or
                     _vmem_footprint_bytes(g, num_pad, num_pad, dim, pred_itemsize) > budget):
        g -= 1
    # If a whole (num_pad, num_pad) tile is still too big (matters on v7x's
    # 64 MiB VMEM), tile the prediction-row axis; lse is per-row so no recompute.
    tile_r = num_pad
    while tile_r % 16 == 0 and _vmem_footprint_bytes(g, tile_r, num_pad, dim, pred_itemsize) > budget:
        tile_r //= 2
    return g, tile_r


def pallas_cost_matrix(preds, targets):
    """preds: (B, N, D) float; targets: (B, N) int -> cost (B, N, N) f32."""
    batch, num, dim = preds.shape
    num_pad = _round_up(num, 128)          # lane-dense output stores, aligned rows

    preds_p = jnp.pad(preds, ((0, 0), (0, num_pad - num), (0, 0)))
    tgt_p = jnp.pad(targets.astype(jnp.int32), ((0, 0), (0, num_pad - num)))
    tgt_p = tgt_p[:, None, :]              # (B, 1, Np): num on the lane axis

    g, tile_r = _choose_tiling(batch, num_pad, dim, preds_p.dtype.itemsize)
    grid = (batch // g, num_pad // tile_r)

    cost_pad = pl.pallas_call(
        _cost_matrix_kernel,
        out_shape=jax.ShapeDtypeStruct((batch, num_pad, num_pad), jnp.float32),
        grid_spec=pltpu.PrefetchScalarGridSpec(
            num_scalar_prefetch=0,
            grid=grid,
            in_specs=[
                pl.BlockSpec((g, tile_r, dim), lambda b, r: (b, r, 0)),
                pl.BlockSpec((g, 1, num_pad), lambda b, r: (b, 0, 0)),
            ],
            out_specs=pl.BlockSpec((g, tile_r, num_pad), lambda b, r: (b, r, 0)),
        ),
        compiler_params=pltpu.CompilerParams(
            dimension_semantics=("parallel", "parallel"),
            vmem_limit_bytes=32 * 1024 * 1024),
    )(preds_p, tgt_p)

    return cost_pad[:, :num, :num]


# ---------------------------------------------------------------------------
# Host-side assignment + Matcher wrapper (mirrors the torch module)
# ---------------------------------------------------------------------------
def _linear_sum_assignment(cost):
    if _scipy_lsa is not None:
        return _scipy_lsa(cost)
    # TODO(synk): the Hungarian algorithm is a sequential combinatorial solver
    # with no clean Pallas/TPU equivalent; this exact brute-force fallback is
    # only for tiny square matrices (scipy is the real path).
    n_rows, n_cols = cost.shape
    assert n_rows == n_cols and n_rows <= 9, "brute-force fallback needs a small square cost"
    rows = np.arange(n_rows)
    best_perm, best_val = None, np.inf
    for perm in itertools.permutations(range(n_cols)):
        val = cost[rows, list(perm)].sum()
        if val < best_val:
            best_val, best_perm = val, perm
    return rows, np.asarray(best_perm, dtype=np.int64)


class Matcher:
    """JAX/Pallas port of the setmtr Matcher.

    Implements the 2-D-target branch with criterion = CrossEntropyLoss(reduction='none').
    """

    def __init__(self, num_classes=None):
        self.num_classes = num_classes

    def __call__(self, preds, targets, masks=None):
        batch, num, dim = preds.shape
        assert targets.ndim == 2, "this port implements the 2-D target branch"
        # TODO(synk): 3-D (soft-target) branch with an arbitrary criterion not implemented.

        cost = pallas_cost_matrix(preds, targets)
        cost_np = np.asarray(jax.device_get(cost))               # (B, N, N)

        if masks is None:
            masks = [None] * batch

        index_preds, index_targets = [], []
        for i, (cost_matrix, m) in enumerate(zip(cost_np, masks)):
            if m is not None:
                midx = np.where(np.asarray(m))[0]
                cost_matrix = cost_matrix[:, midx]
            idx_p, idx_t = _linear_sum_assignment(cost_matrix)
            idx_p = np.asarray(idx_p, dtype=np.int64)
            idx_t = np.asarray(idx_t, dtype=np.int64)
            if m is not None:
                idx_t = midx[idx_t].astype(np.int64)
            idx_b = np.full(len(idx_p), i, dtype=np.int64)
            index_preds.append([idx_b, idx_p])
            index_targets.append([idx_b, idx_t])

        index_preds = [np.concatenate(parts) for parts in zip(*index_preds)]
        index_targets = [np.concatenate(parts) for parts in zip(*index_targets)]
        return index_preds, index_targets


def _reference_cost(preds, targets):
    """Pure-JAX reference: cost[b,i,j] = lse(preds[b,i]) - preds[b,i,targets[b,j]]."""
    p = preds.astype(jnp.float32)
    lse = jax.nn.logsumexp(p, axis=-1)                                        # (B, N)
    idx = jnp.broadcast_to(targets[:, None, :].astype(jnp.int32),
                           (p.shape[0], p.shape[1], targets.shape[1]))
    picked = jnp.take_along_axis(p, idx, axis=2)                              # (B, N, N)
    return lse[:, :, None] - picked


if __name__ == "__main__":
    key = jax.random.PRNGKey(0)
    batch, num, dim = 2, 8, 32  # dim doubles as the number of classes

    k1, k2 = jax.random.split(key)
    preds = jax.random.normal(k1, (batch, num, dim), dtype=jnp.float32)
    targets = jax.random.randint(k2, (batch, num), 0, dim, dtype=jnp.int32)

    # Run the Pallas kernel once and check against a pure-JAX reference.
    cost = pallas_cost_matrix(preds, targets)
    cost = jax.block_until_ready(cost)
    ref = _reference_cost(preds, targets)
    # f32 MXU matmuls decompose into bf16 passes -> ~1e-5 relative gather error.
    np.testing.assert_allclose(np.asarray(cost), np.asarray(ref), rtol=2e-4, atol=2e-4)

    # Full Matcher forward (host-side linear sum assignment, as in the torch module).
    matcher = Matcher(num_classes=dim)
    index_preds, index_targets = matcher(preds, targets, masks=None)
    assert index_preds[0].shape == (batch * num,)
    assert index_preds[1].shape == (batch * num,)
    assert index_targets[0].shape == (batch * num,)
    assert index_targets[1].shape == (batch * num,)

    print("KERNEL_OK")
</pallas_src>

<mosaic_0001>
module attributes {stable_mosaic.version = 11 : i64} {
  func.func @_cost_matrix_kernel(%arg0: i32, %arg1: i32, %arg2: memref<2x128x32xf32, #tpu.memory_space<vmem>>, %arg3: memref<2x1x128xi32, #tpu.memory_space<vmem>>, %arg4: memref<2x128x128xf32, #tpu.memory_space<vmem>>) attributes {dimension_semantics = [#tpu.dimension_semantics<parallel>, #tpu.dimension_semantics<parallel>], iteration_bounds = array<i64: 1, 1>, scalar_prefetch = 0 : i64, scratch_operands = 0 : i64, tpu.core_type = #tpu.core_type<tc>, window_params = [{transform_indices = @transform_0, window_bounds = array<i64: 2, 128, 32>}, {transform_indices = @transform_1, window_bounds = array<i64: 2, 1, 128>}, {transform_indices = @transform_2, window_bounds = array<i64: 2, 128, 128>}]} {
    %c0 = arith.constant 0 : index
    %c0_0 = arith.constant 0 : index
    %c0_1 = arith.constant 0 : index
    %0 = vector.load %arg2[%c0, %c0_0, %c0_1] : memref<2x128x32xf32, #tpu.memory_space<vmem>>, vector<2x128x32xf32>
    %c0_2 = arith.constant 0 : index
    %c0_3 = arith.constant 0 : index
    %c0_4 = arith.constant 0 : index
    %1 = vector.load %arg3[%c0_2, %c0_3, %c0_4] : memref<2x1x128xi32, #tpu.memory_space<vmem>>, vector<2x1x128xi32>
    %cst = arith.constant dense<0xFF800000> : vector<2x128xf32>
    %2 = vector.multi_reduction <maximumf>, %0, %cst [2] : vector<2x128x32xf32> to vector<2x128xf32>
    %3 = vector.shape_cast %2 : vector<2x128xf32> to vector<2x128x1xf32>
    %4 = vector.broadcast %3 : vector<2x128x1xf32> to vector<2x128x32xf32>
    %5 = arith.subf %0, %4 : vector<2x128x32xf32>
    %6 = math.exp %5 : vector<2x128x32xf32>
    %cst_5 = arith.constant dense<0.000000e+00> : vector<2x128xf32>
    %7 = vector.multi_reduction <add>, %6, %cst_5 [2] : vector<2x128x32xf32> to vector<2x128xf32>
    %8 = vector.shape_cast %7 : vector<2x128xf32> to vector<2x128x1xf32>
    %9 = math.log %8 : vector<2x128x1xf32>
    %10 = arith.addf %3, %9 : vector<2x128x1xf32>
    %11 = tpu.iota {dimensions = array<i32: 1>} : vector<2x32x128xi32>
    %12 = vector.broadcast %1 : vector<2x1x128xi32> to vector<2x32x128xi32>
    %13 = arith.cmpi eq, %11, %12 : vector<2x32x128xi32>
    %14 = arith.extui %13 : vector<2x32x128xi1> to vector<2x32x128xi32>
    %15 = arith.sitofp %14 : vector<2x32x128xi32> to vector<2x32x128xf32>
    %cst_6 = arith.constant dense<0.000000e+00> : vector<2x128x128xf32>
    %16 = tpu.matmul %0, %15, %cst_6 {dimension_numbers = #tpu.dot_dimension_numbers<[2], [1], [1], [2], [0, 0, 0, 1, 1, 2], [0], [0]>} : vector<2x128x32xf32>, vector<2x32x128xf32>, vector<2x128x128xf32> -> vector<2x128x128xf32>
    %17 = vector.broadcast %10 : vector<2x128x1xf32> to vector<2x128x128xf32>
    %18 = arith.subf %17, %16 : vector<2x128x128xf32>
    %c0_7 = arith.constant 0 : index
    %c0_8 = arith.constant 0 : index
    %c0_9 = arith.constant 0 : index
    %19 = vector.load %arg4[%c0_7, %c0_8, %c0_9] : memref<2x128x128xf32, #tpu.memory_space<vmem>>, vector<2x128x128xf32>
    tpu.vector_store %arg4[%c0_7, %c0_8, %c0_9], %18 {strides = array<i32>} : memref<2x128x128xf32, #tpu.memory_space<vmem>>, vector<2x128x128xf32>,
    return
  }
  func.func @transform_0(%arg0: i32, %arg1: i32) -> (i32, i32, i32) {
    %c0_i32 = arith.constant 0 : i32
    %c0_i32_0 = arith.constant 0 : i32
    return %arg0, %arg1, %c0_i32 : i32, i32, i32
  }
  func.func @transform_1(%arg0: i32, %arg1: i32) -> (i32, i32, i32) {
    %c0_i32 = arith.constant 0 : i32
    %c0_i32_0 = arith.constant 0 : i32
    %c0_i32_1 = arith.constant 0 : i32
    return %arg0, %c0_i32, %c0_i32_0 : i32, i32, i32
  }
  func.func @transform_2(%arg0: i32, %arg1: i32) -> (i32, i32, i32) {
    %c0_i32 = arith.constant 0 : i32
    %c0_i32_0 = arith.constant 0 : i32
    return %arg0, %arg1, %c0_i32 : i32, i32, i32
  }
}

</mosaic_0001>

<llo_original>
// kernel: tpu_custom_call.1
$region0: #{tpu_custom_call.1}
  #allocation0 [shape = 'u32[]', space=smem, size = 0x4, offset = 0x4, fixed_abs, tag = 'smem constant byte address 0x4 - core index']
  #allocation1 [shape = 'u32[144,128]{1,0:T(1,128)}', space=vmem, size = 0x12000, scoped, tag = 'internal scratch']
  %s0 = inlined_call_operand.vmem [shape: f32[2,128,32], index: 0, kind: input, shape index: {}]
  %s1 = inlined_call_operand.vmem [shape: s32[2,1,128], index: 1, kind: input, shape index: {}]
  %s2 = inlined_call_operand.hbm [shape: f32[2,128,128], index: 2, kind: output, shape index: {}]
  %s3 = sld [smem:[#allocation0]]
  $region18: #{tpu_custom_call.1} parent=0
    _
  %s5 = ssub.s32 1, %s3
  %s6 = scalar_select 0, %s5, %s3
  $region1: #{tpu_custom_call.1} parent=0
    #allocation2 [shape = 'u8[131072]{0}', space=vmem, size = 0x20000, scoped, tag = 'output window, operand 0, single buffered']
    #allocation3 [shape = 's32[1]{0}', space=sflag, size = 0x4, scoped, tag = 'scoped memory for tpu_custom_call.1']
    %7 = vsyncpa [#allocation3], 0
    // Predicated region
    $region2: #{tpu_custom_call.1} parent=1 // pred_check
      _
    $region3: #{tpu_custom_call.1} parent=1 // pred_check_branch
      %9 = sbr.rel (0) target = $region5
    $region4: #{tpu_custom_call.1} parent=1 // pred_region
      _
    $region5: #{tpu_custom_call.1} parent=1 // pred_fallthru
      _
    // Predicated region
    $region6: #{tpu_custom_call.1} parent=1 // pred_check
      _
    $region7: #{tpu_custom_call.1} parent=1 // pred_check_branch
      %11 = sbr.rel (0) target = $region9
    $region8: #{tpu_custom_call.1} parent=1 // pred_region
      _
    $region9: #{tpu_custom_call.1} parent=1 // pred_fallthru
      _
    %v12 = vld [vmem:[%s0] sm:$0xff]
    %v13 = vld [vmem:[%s0 + $0x8] sm:$0xff]
    %v14 = vld [vmem:[%s0 + $0x10] sm:$0xff]
    %v15 = vld [vmem:[%s0 + $0x18] sm:$0xff]
    %v16 = vld [vmem:[%s0 + $0x20] sm:$0xff]
    %v17 = vld [vmem:[%s0 + $0x28] sm:$0xff]
    %v18 = vld [vmem:[%s0 + $0x30] sm:$0xff]
    %v19 = vld [vmem:[%s0 + $0x38] sm:$0xff]
    %v20 = vld [vmem:[%s0 + $0x40] sm:$0xff]
    %v21 = vld [vmem:[%s0 + $0x48] sm:$0xff]
    %v22 = vld [vmem:[%s0 + $0x50] sm:$0xff]
    %v23 = vld [vmem:[%s0 + $0x58] sm:$0xff]
    %v24 = vld [vmem:[%s0 + $0x60] sm:$0xff]
    %v25 = vld [vmem:[%s0 + $0x68] sm:$0xff]
    %v26 = vld [vmem:[%s0 + $0x70] sm:$0xff]
    %v27 = vld [vmem:[%s0 + $0x78] sm:$0xff]
    %v28 = vld [vmem:[%s0 + $0x80] sm:$0xff]
    %v29 = vld [vmem:[%s0 + $0x88] sm:$0xff]
    %v30 = vld [vmem:[%s0 + $0x90] sm:$0xff]
    %v31 = vld [vmem:[%s0 + $0x98] sm:$0xff]
    %v32 = vld [vmem:[%s0 + $0xa0] sm:$0xff]
    %v33 = vld [vmem:[%s0 + $0xa8] sm:$0xff]
    %v34 = vld [vmem:[%s0 + $0xb0] sm:$0xff]
    %v35 = vld [vmem:[%s0 + $0xb8] sm:$0xff]
    %v36 = vld [vmem:[%s0 + $0xc0] sm:$0xff]
    %v37 = vld [vmem:[%s0 + $0xc8] sm:$0xff]
    %v38 = vld [vmem:[%s0 + $0xd0] sm:$0xff]
    %v39 = vld [vmem:[%s0 + $0xd8] sm:$0xff]
    %v40 = vld [vmem:[%s0 + $0xe0] sm:$0xff]
    %v41 = vld [vmem:[%s0 + $0xe8] sm:$0xff]
    %v42 = vld [vmem:[%s0 + $0xf0] sm:$0xff]
    %v43 = vld [vmem:[%s0 + $0xf8] sm:$0xff]
    %v44 = vld [vmem:[%s1] sm:$0x1]
    %v45 = vld [vmem:[%s1 + $0x1] sm:$0x1]
    %vm46 = vcmask 261120
    %v47 = vsel %vm46, %v12, -inf
    %48 = vmax.xlane.f32.xlu0 %v47
    %v49 = vpop.xlane.xlu0 %48
    %v50 = vsel %vm46, %v13, -inf
    %51 = vmax.xlane.f32.xlu0 %v50
    %v52 = vpop.xlane.xlu0 %51
    %v53 = vsel %vm46, %v14, -inf
    %54 = vmax.xlane.f32.xlu0 %v53
    %v55 = vpop.xlane.xlu0 %54
    %v56 = vsel %vm46, %v15, -inf
    %57 = vmax.xlane.f32.xlu0 %v56
    %v58 = vpop.xlane.xlu0 %57
    %v59 = vsel %vm46, %v16, -inf
    %60 = vmax.xlane.f32.xlu0 %v59
    %v61 = vpop.xlane.xlu0 %60
    %v62 = vsel %vm46, %v17, -inf
    %63 = vmax.xlane.f32.xlu0 %v62
    %v64 = vpop.xlane.xlu0 %63
    %v65 = vsel %vm46, %v18, -inf
    %66 = vmax.xlane.f32.xlu0 %v65
    %v67 = vpop.xlane.xlu0 %66
    %v68 = vsel %vm46, %v19, -inf
    %69 = vmax.xlane.f32.xlu0 %v68
    %v70 = vpop.xlane.xlu0 %69
    %v71 = vsel %vm46, %v20, -inf
    %72 = vmax.xlane.f32.xlu0 %v71
    %v73 = vpop.xlane.xlu0 %72
    %v74 = vsel %vm46, %v21, -inf
    %75 = vmax.xlane.f32.xlu0 %v74
    %v76 = vpop.xlane.xlu0 %75
    %v77 = vsel %vm46, %v22, -inf
    %78 = vmax.xlane.f32.xlu0 %v77
    %v79 = vpop.xlane.xlu0 %78
    %v80 = vsel %vm46, %v23, -inf
    %81 = vmax.xlane.f32.xlu0 %v80
    %v82 = vpop.xlane.xlu0 %81
    %v83 = vsel %vm46, %v24, -inf
    %84 = vmax.xlane.f32.xlu0 %v83
    %v85 = vpop.xlane.xlu0 %84
    %v86 = vsel %vm46, %v25, -inf
    %87 = vmax.xlane.f32.xlu0 %v86
    %v88 = vpop.xlane.xlu0 %87
    %v89 = vsel %vm46, %v26, -inf
    %90 = vmax.xlane.f32.xlu0 %v89
    %v91 = vpop.xlane.xlu0 %90
    %v92 = vsel %vm46, %v27, -inf
    %93 = vmax.xlane.f32.xlu0 %v92
    %v94 = vpop.xlane.xlu0 %93
    %v95 = vsel %vm46, %v28, -inf
    %96 = vmax.xlane.f32.xlu0 %v95
    %v97 = vpop.xlane.xlu0 %96
    %v98 = vsel %vm46, %v29, -inf
    %99 = vmax.xlane.f32.xlu0 %v98
    %v100 = vpop.xlane.xlu0 %99
    %v101 = vsel %vm46, %v30, -inf
    %102 = vmax.xlane.f32.xlu0 %v101
    %v103 = vpop.xlane.xlu0 %102
    %v104 = vsel %vm46, %v31, -inf
    %105 = vmax.xlane.f32.xlu0 %v104
    %v106 = vpop.xlane.xlu0 %105
    %v107 = vsel %vm46, %v32, -inf
    %108 = vmax.xlane.f32.xlu0 %v107
    %v109 = vpop.xlane.xlu0 %108
    %v110 = vsel %vm46, %v33, -inf
    %111 = vmax.xlane.f32.xlu0 %v110
    %v112 = vpop.xlane.xlu0 %111
    %v113 = vsel %vm46, %v34, -inf
    %114 = vmax.xlane.f32.xlu0 %v113
    %v115 = vpop.xlane.xlu0 %114
    %v116 = vsel %vm46, %v35, -inf
    %117 = vmax.xlane.f32.xlu0 %v116
    %v118 = vpop.xlane.xlu0 %117
    %v119 = vsel %vm46, %v36, -inf
    %120 = vmax.xlane.f32.xlu0 %v119
    %v121 = vpop.xlane.xlu0 %120
    %v122 = vsel %vm46, %v37, -inf
    %123 = vmax.xlane.f32.xlu0 %v122
    %v124 = vpop.xlane.xlu0 %123
    %v125 = vsel %vm46, %v38, -inf
    %126 = vmax.xlane.f32.xlu0 %v125
    %v127 = vpop.xlane.xlu0 %126
    %v128 = vsel %vm46, %v39, -inf
    %129 = vmax.xlane.f32.xlu0 %v128
    %v130 = vpop.xlane.xlu0 %129
    %v131 = vsel %vm46, %v40, -inf
    %132 = vmax.xlane.f32.xlu0 %v131
    %v133 = vpop.xlane.xlu0 %132
    %v134 = vsel %vm46, %v41, -inf
    %135 = vmax.xlane.f32.xlu0 %v134
    %v136 = vpop.xlane.xlu0 %135
    %v137 = vsel %vm46, %v42, -inf
    %138 = vmax.xlane.f32.xlu0 %v137
    %v139 = vpop.xlane.xlu0 %138
    %v140 = vsel %vm46, %v43, -inf
    %141 = vmax.xlane.f32.xlu0 %v140
    %v142 = vpop.xlane.xlu0 %141
    %v143 = vsub.f32 %v12, %v49
    %v144 = vsub.f32 %v13, %v52
    %v145 = vsub.f32 %v14, %v55
    %v146 = vsub.f32 %v15, %v58
    %v147 = vsub.f32 %v16, %v61
    %v148 = vsub.f32 %v17, %v64
    %v149 = vsub.f32 %v18, %v67
    %v150 = vsub.f32 %v19, %v70
    %v151 = vsub.f32 %v20, %v73
    %v152 = vsub.f32 %v21, %v76
    %v153 = vsub.f32 %v22, %v79
    %v154 = vsub.f32 %v23, %v82
    %v155 = vsub.f32 %v24, %v85
    %v156 = vsub.f32 %v25, %v88
    %v157 = vsub.f32 %v26, %v91
    %v158 = vsub.f32 %v27, %v94
    %v159 = vsub.f32 %v28, %v97
    %v160 = vsub.f32 %v29, %v100
    %v161 = vsub.f32 %v30, %v103
    %v162 = vsub.f32 %v31, %v106
    %v163 = vsub.f32 %v32, %v109
    %v164 = vsub.f32 %v33, %v112
    %v165 = vsub.f32 %v34, %v115
    %v166 = vsub.f32 %v35, %v118
    %v167 = vsub.f32 %v36, %v121
    %v168 = vsub.f32 %v37, %v124
    %v169 = vsub.f32 %v38, %v127
    %v170 = vsub.f32 %v39, %v130
    %v171 = vsub.f32 %v40, %v133
    %v172 = vsub.f32 %v41, %v136
    %v173 = vsub.f32 %v42, %v139
    %v174 = vsub.f32 %v43, %v142
    %v175 = vmul.f32 %v143, 1.442695
    %v176 = vpow.pop %v175
    %v177 = vmul.f32 %v144, 1.442695
    %v178 = vpow.pop %v177
    %v179 = vmul.f32 %v145, 1.442695
    %v180 = vpow.pop %v179
    %v181 = vmul.f32 %v146, 1.442695
    %v182 = vpow.pop %v181
    %v183 = vmul.f32 %v147, 1.442695
    %v184 = vpow.pop %v183
    %v185 = vmul.f32 %v148, 1.442695
    %v186 = vpow.pop %v185
    %v187 = vmul.f32 %v149, 1.442695
    %v188 = vpow.pop %v187
    %v189 = vmul.f32 %v150, 1.442695
    %v190 = vpow.pop %v189
    %v191 = vmul.f32 %v151, 1.442695
    %v192 = vpow.pop %v191
    %v193 = vmul.f32 %v152, 1.442695
    %v194 = vpow.pop %v193
    %v195 = vmul.f32 %v153, 1.442695
    %v196 = vpow.pop %v195
    %v197 = vmul.f32 %v154, 1.442695
    %v198 = vpow.pop %v197
    %v199 = vmul.f32 %v155, 1.442695
    %v200 = vpow.pop %v199
    %v201 = vmul.f32 %v156, 1.442695
    %v202 = vpow.pop %v201
    %v203 = vmul.f32 %v157, 1.442695
    %v204 = vpow.pop %v203
    %v205 = vmul.f32 %v158, 1.442695
    %v206 = vpow.pop %v205
    %v207 = vmul.f32 %v159, 1.442695
    %v208 = vpow.pop %v207
    %v209 = vmul.f32 %v160, 1.442695
    %v210 = vpow.pop %v209
    %v211 = vmul.f32 %v161, 1.442695
    %v212 = vpow.pop %v211
    %v213 = vmul.f32 %v162, 1.442695
    %v214 = vpow.pop %v213
    %v215 = vmul.f32 %v163, 1.442695
    %v216 = vpow.pop %v215
    %v217 = vmul.f32 %v164, 1.442695
    %v218 = vpow.pop %v217
    %v219 = vmul.f32 %v165, 1.442695
    %v220 = vpow.pop %v219
    %v221 = vmul.f32 %v166, 1.442695
    %v222 = vpow.pop %v221
    %v223 = vmul.f32 %v167, 1.442695
    %v224 = vpow.pop %v223
    %v225 = vmul.f32 %v168, 1.442695
    %v226 = vpow.pop %v225
    %v227 = vmul.f32 %v169, 1.442695
    %v228 = vpow.pop %v227
    %v229 = vmul.f32 %v170, 1.442695
    %v230 = vpow.pop %v229
    %v231 = vmul.f32 %v171, 1.442695
    %v232 = vpow.pop %v231
    %v233 = vmul.f32 %v172, 1.442695
    %v234 = vpow.pop %v233
    %v235 = vmul.f32 %v173, 1.442695
    %v236 = vpow.pop %v235
    %v237 = vmul.f32 %v174, 1.442695
    %v238 = vpow.pop %v237
    %v239 = vsel %vm46, %v176, 0.0
    %240 = vadd.xlane.f32.xlu0 %v239
    %v241 = vpop.xlane.xlu0 %240
    %v242 = vsel %vm46, %v178, 0.0
    %243 = vadd.xlane.f32.xlu0 %v242
    %v244 = vpop.xlane.xlu0 %243
    %v245 = vsel %vm46, %v180, 0.0
    %246 = vadd.xlane.f32.xlu0 %v245
    %v247 = vpop.xlane.xlu0 %246
    %v248 = vsel %vm46, %v182, 0.0
    %249 = vadd.xlane.f32.xlu0 %v248
    %v250 = vpop.xlane.xlu0 %249
    %v251 = vsel %vm46, %v184, 0.0
    %252 = vadd.xlane.f32.xlu0 %v251
    %v253 = vpop.xlane.xlu0 %252
    %v254 = vsel %vm46, %v186, 0.0
    %255 = vadd.xlane.f32.xlu0 %v254
    %v256 = vpop.xlane.xlu0 %255
    %v257 = vsel %vm46, %v188, 0.0
    %258 = vadd.xlane.f32.xlu0 %v257
    %v259 = vpop.xlane.xlu0 %258
    %v260 = vsel %vm46, %v190, 0.0
    %261 = vadd.xlane.f32.xlu0 %v260
    %v262 = vpop.xlane.xlu0 %261
    %v263 = vsel %vm46, %v192, 0.0
    %264 = vadd.xlane.f32.xlu0 %v263
    %v265 = vpop.xlane.xlu0 %264
    %v266 = vsel %vm46, %v194, 0.0
    %267 = vadd.xlane.f32.xlu0 %v266
    %v268 = vpop.xlane.xlu0 %267
    %v269 = vsel %vm46, %v196, 0.0
    %270 = vadd.xlane.f32.xlu0 %v269
    %v271 = vpop.xlane.xlu0 %270
    %v272 = vsel %vm46, %v198, 0.0
    %273 = vadd.xlane.f32.xlu0 %v272
    %v274 = vpop.xlane.xlu0 %273
    %v275 = vsel %vm46, %v200, 0.0
    %276 = vadd.xlane.f32.xlu0 %v275
    %v277 = vpop.xlane.xlu0 %276
    %v278 = vsel %vm46, %v202, 0.0
    %279 = vadd.xlane.f32.xlu0 %v278
    %v280 = vpop.xlane.xlu0 %279
    %v281 = vsel %vm46, %v204, 0.0
    %282 = vadd.xlane.f32.xlu0 %v281
    %v283 = vpop.xlane.xlu0 %282
    %v284 = vsel %vm46, %v206, 0.0
    %285 = vadd.xlane.f32.xlu0 %v284
    %v286 = vpop.xlane.xlu0 %285
    %v287 = vsel %vm46, %v208, 0.0
    %288 = vadd.xlane.f32.xlu0 %v287
    %v289 = vpop.xlane.xlu0 %288
    %v290 = vsel %vm46, %v210, 0.0
    %291 = vadd.xlane.f32.xlu0 %v290
    %v292 = vpop.xlane.xlu0 %291
    %v293 = vsel %vm46, %v212, 0.0
    %294 = vadd.xlane.f32.xlu0 %v293
    %v295 = vpop.xlane.xlu0 %294
    %v296 = vsel %vm46, %v214, 0.0
    %297 = vadd.xlane.f32.xlu0 %v296
    %v298 = vpop.xlane.xlu0 %297
    %v299 = vsel %vm46, %v216, 0.0
    %300 = vadd.xlane.f32.xlu0 %v299
    %v301 = vpop.xlane.xlu0 %300
    %v302 = vsel %vm46, %v218, 0.0
    %303 = vadd.xlane.f32.xlu0 %v302
    %v304 = vpop.xlane.xlu0 %303
    %v305 = vsel %vm46, %v220, 0.0
    %306 = vadd.xlane.f32.xlu0 %v305
    %v307 = vpop.xlane.xlu0 %306
    %v308 = vsel %vm46, %v222, 0.0
    %309 = vadd.xlane.f32.xlu0 %v308
    %v310 = vpop.xlane.xlu0 %309
    %v311 = vsel %vm46, %v224, 0.0
    %312 = vadd.xlane.f32.xlu0 %v311
    %v313 = vpop.xlane.xlu0 %312
    %v314 = vsel %vm46, %v226, 0.0
    %315 = vadd.xlane.f32.xlu0 %v314
    %v316 = vpop.xlane.xlu0 %315
    %v317 = vsel %vm46, %v228, 0.0
    %318 = vadd.xlane.f32.xlu0 %v317
    %v319 = vpop.xlane.xlu0 %318
    %v320 = vsel %vm46, %v230, 0.0
    %321 = vadd.xlane.f32.xlu0 %v320
    %v322 = vpop.xlane.xlu0 %321
    %v323 = vsel %vm46, %v232, 0.0
    %324 = vadd.xlane.f32.xlu0 %v323
    %v325 = vpop.xlane.xlu0 %324
    %v326 = vsel %vm46, %v234, 0.0
    %327 = vadd.xlane.f32.xlu0 %v326
    %v328 = vpop.xlane.xlu0 %327
    %v329 = vsel %vm46, %v236, 0.0
    %330 = vadd.xlane.f32.xlu0 %v329
    %v331 = vpop.xlane.xlu0 %330
    %v332 = vsel %vm46, %v238, 0.0
    %333 = vadd.xlane.f32.xlu0 %v332
    %v334 = vpop.xlane.xlu0 %333
    %v335 = vlog2.pop %v241
    %v336 = vmul.f32 %v335, 0.6931472
    %v337 = vlog2.pop %v244
    %v338 = vmul.f32 %v337, 0.6931472
    %v339 = vlog2.pop %v247
    %v340 = vmul.f32 %v339, 0.6931472
    %v341 = vlog2.pop %v250
    %v342 = vmul.f32 %v341, 0.6931472
    %v343 = vlog2.pop %v253
    %v344 = vmul.f32 %v343, 0.6931472
    %v345 = vlog2.pop %v256
    %v346 = vmul.f32 %v345, 0.6931472
    %v347 = vlog2.pop %v259
    %v348 = vmul.f32 %v347, 0.6931472
    %v349 = vlog2.pop %v262
    %v350 = vmul.f32 %v349, 0.6931472
    %v351 = vlog2.pop %v265
    %v352 = vmul.f32 %v351, 0.6931472
    %v353 = vlog2.pop %v268
    %v354 = vmul.f32 %v353, 0.6931472
    %v355 = vlog2.pop %v271
    %v356 = vmul.f32 %v355, 0.6931472
    %v357 = vlog2.pop %v274
    %v358 = vmul.f32 %v357, 0.6931472
    %v359 = vlog2.pop %v277
    %v360 = vmul.f32 %v359, 0.6931472
    %v361 = vlog2.pop %v280
    %v362 = vmul.f32 %v361, 0.6931472
    %v363 = vlog2.pop %v283
    %v364 = vmul.f32 %v363, 0.6931472
    %v365 = vlog2.pop %v286
    %v366 = vmul.f32 %v365, 0.6931472
    %v367 = vlog2.pop %v289
    %v368 = vmul.f32 %v367, 0.6931472
    %v369 = vlog2.pop %v292
    %v370 = vmul.f32 %v369, 0.6931472
    %v371 = vlog2.pop %v295
    %v372 = vmul.f32 %v371, 0.6931472
    %v373 = vlog2.pop %v298
    %v374 = vmul.f32 %v373, 0.6931472
    %v375 = vlog2.pop %v301
    %v376 = vmul.f32 %v375, 0.6931472
    %v377 = vlog2.pop %v304
    %v378 = vmul.f32 %v377, 0.6931472
    %v379 = vlog2.pop %v307
    %v380 = vmul.f32 %v379, 0.6931472
    %v381 = vlog2.pop %v310
    %v382 = vmul.f32 %v381, 0.6931472
    %v383 = vlog2.pop %v313
    %v384 = vmul.f32 %v383, 0.6931472
    %v385 = vlog2.pop %v316
    %v386 = vmul.f32 %v385, 0.6931472
    %v387 = vlog2.pop %v319
    %v388 = vmul.f32 %v387, 0.6931472
    %v389 = vlog2.pop %v322
    %v390 = vmul.f32 %v389, 0.6931472
    %v391 = vlog2.pop %v325
    %v392 = vmul.f32 %v391, 0.6931472
    %v393 = vlog2.pop %v328
    %v394 = vmul.f32 %v393, 0.6931472
    %v395 = vlog2.pop %v331
    %v396 = vmul.f32 %v395, 0.6931472
    %v397 = vlog2.pop %v334
    %v398 = vmul.f32 %v397, 0.6931472
    %v399 = vadd.f32 %v49, %v336
    %v400 = vadd.f32 %v52, %v338
    %v401 = vadd.f32 %v55, %v340
    %v402 = vadd.f32 %v58, %v342
    %v403 = vadd.f32 %v61, %v344
    %v404 = vadd.f32 %v64, %v346
    %v405 = vadd.f32 %v67, %v348
    %v406 = vadd.f32 %v70, %v350
    %v407 = vadd.f32 %v73, %v352
    %v408 = vadd.f32 %v76, %v354
    %v409 = vadd.f32 %v79, %v356
    %v410 = vadd.f32 %v82, %v358
    %v411 = vadd.f32 %v85, %v360
    %v412 = vadd.f32 %v88, %v362
    %v413 = vadd.f32 %v91, %v364
    %v414 = vadd.f32 %v94, %v366
    %v415 = vadd.f32 %v97, %v368
    %v416 = vadd.f32 %v100, %v370
    %v417 = vadd.f32 %v103, %v372
    %v418 = vadd.f32 %v106, %v374
    %v419 = vadd.f32 %v109, %v376
    %v420 = vadd.f32 %v112, %v378
    %v421 = vadd.f32 %v115, %v380
    %v422 = vadd.f32 %v118, %v382
    %v423 = vadd.f32 %v121, %v384
    %v424 = vadd.f32 %v124, %v386
    %v425 = vadd.f32 %v127, %v388
    %v426 = vadd.f32 %v130, %v390
    %v427 = vadd.f32 %v133, %v392
    %v428 = vadd.f32 %v136, %v394
    %v429 = vadd.f32 %v139, %v396
    %v430 = vadd.f32 %v142, %v398
    %v431 = vlaneseq
    %v432 = vshrl.u32 %v431, 7
    %v433 = vadd.s32 %v432, 8
    %v434 = vadd.s32 %v432, 16
    %v435 = vadd.s32 %v432, 24
    %v436 = vlaneseq
    %v437 = vshrl.u32 %v436, 7
    %v438 = vsub.s32 0, %v437
    %v439 = vrot.slane %v44, %v438
    %v440 = vlaneseq
    %v441 = vshrl.u32 %v440, 7
    %v442 = vsub.s32 0, %v441
    %v443 = vrot.slane %v45, %v442
    %vm444 = vcmp.eq.s32.totalorder %v432, %v439
    %vm445 = vcmp.eq.s32.totalorder %v433, %v439
    %vm446 = vcmp.eq.s32.totalorder %v434, %v439
    %vm447 = vcmp.eq.s32.totalorder %v435, %v439
    %vm448 = vcmp.eq.s32.totalorder %v432, %v443
    %vm449 = vcmp.eq.s32.totalorder %v433, %v443
    %vm450 = vcmp.eq.s32.totalorder %v434, %v443
    %vm451 = vcmp.eq.s32.totalorder %v435, %v443
    %v452 = vsel %vm444, 1, 0
    %v453 = vsel %vm445, 1, 0
    %v454 = vsel %vm446, 1, 0
    %v455 = vsel %vm447, 1, 0
    %v456 = vsel %vm448, 1, 0
    %v457 = vsel %vm449, 1, 0
    %v458 = vsel %vm450, 1, 0
    %v459 = vsel %vm451, 1, 0
    %v460 = vcvt.s32.f32 %v452
    %v461 = vcvt.s32.f32 %v453
    %v462 = vcvt.s32.f32 %v454
    %v463 = vcvt.s32.f32 %v455
    %v464 = vcvt.s32.f32 %v456
    %v465 = vcvt.s32.f32 %v457
    %v466 = vcvt.s32.f32 %v458
    %v467 = vcvt.s32.f32 %v459
    %v469 = vsel %vm46, %v12, 0
    %v472 = vsel %vm46, %v13, 0
    %v475 = vsel %vm46, %v14, 0
    %v478 = vsel %vm46, %v15, 0
    %v481 = vsel %vm46, %v16, 0
    %v484 = vsel %vm46, %v17, 0
    %v487 = vsel %vm46, %v18, 0
    %v490 = vsel %vm46, %v19, 0
    %v493 = vsel %vm46, %v20, 0
    %v496 = vsel %vm46, %v21, 0
    %v499 = vsel %vm46, %v22, 0
    %v502 = vsel %vm46, %v23, 0
    %v505 = vsel %vm46, %v24, 0
    %v508 = vsel %vm46, %v25, 0
    %v511 = vsel %vm46, %v26, 0
    %v514 = vsel %vm46, %v27, 0
    %516 = vmatprep.subr.mxu0 0.0
    %517 = vmatpush1.msra.mxu0 %v460
    %518 = vmatprep.subr.mxu0 0.0
    %519 = vmatpush1.msra.mxu0 %v461
    %520 = vmatprep.subr.mxu0 0.0
    %521 = vmatpush1.msra.mxu0 %v462
    %522 = vmatprep.subr.mxu0 0.0
    %523 = vmatpush1.msra.mxu0 %v463
    %524 = vmatprep.subr.mxu0 0.0
    %525 = vmatpush1.msra.mxu0 0.0
    %526 = vmatprep.subr.mxu0 0.0
    %527 = vmatpush1.msra.mxu0 0.0
    %528 = vmatprep.subr.mxu0 0.0
    %529 = vmatpush1.msra.mxu0 0.0
    %530 = vmatprep.subr.mxu0 0.0
    %531 = vmatpush1.msra.mxu0 0.0
    %532 = vmatprep.subr.mxu0 0.0
    %533 = vmatpush1.msra.mxu0 0.0
    %534 = vmatprep.subr.mxu0 0.0
    %535 = vmatpush1.msra.mxu0 0.0
    %536 = vmatprep.subr.mxu0 0.0
    %537 = vmatpush1.msra.mxu0 0.0
    %538 = vmatprep.subr.mxu0 0.0
    %539 = vmatpush1.msra.mxu0 0.0
    %540 = vmatprep.subr.mxu0 0.0
    %541 = vmatpush1.msra.mxu0 0.0
    %542 = vmatprep.subr.mxu0 0.0
    %543 = vmatpush1.msra.mxu0 0.0
    %544 = vmatprep.subr.mxu0 0.0
    %545 = vmatpush1.msra.mxu0 0.0
    %546 = vmatprep.subr.mxu0 0.0
    %547 = vmatpush1.msra.mxu0 0.0
    %548 = vmatprep.subr.mxu0 0.0
    %549 = vmatpush1.msra.mxu0 0.0
    %550 = vmatprep.subr.mxu0 0.0
    %551 = vmatpush1.msra.mxu0 0.0
    %552 = vmatprep.subr.mxu0 0.0
    %553 = vmatpush1.msra.mxu0 0.0
    %554 = vmatprep.subr.mxu0 0.0
    %555 = vmatpush1.msra.mxu0 0.0
    %556 = vmatprep.subr.mxu0 0.0
    %557 = vmatpush1.msra.mxu0 0.0
    %558 = vmatprep.subr.mxu0 0.0
    %559 = vmatpush1.msra.mxu0 0.0
    %560 = vmatprep.subr.mxu0 0.0
    %561 = vmatpush1.msra.mxu0 0.0
    %562 = vmatprep.subr.mxu0 0.0
    %563 = vmatpush1.msra.mxu0 0.0
    %564 = vmatprep.subr.mxu0 0.0
    %565 = vmatpush1.msra.mxu0 0.0
    %566 = vmatprep.subr.mxu0 0.0
    %567 = vmatpush1.msra.mxu0 0.0
    %568 = vmatprep.subr.mxu0 0.0
    %569 = vmatpush1.msra.mxu0 0.0
    %570 = vmatprep.subr.mxu0 0.0
    %571 = vmatpush1.msra.mxu0 0.0
    %572 = vmatprep.subr.mxu0 0.0
    %573 = vmatpush1.msra.mxu0 0.0
    %574 = vmatprep.subr.mxu0 0.0
    %575 = vmatpush1.msra.mxu0 0.0
    %576 = vmatprep.subr.mxu0 0.0
    %577 = vmatpush1.msra.mxu0 0.0
    %578 = vmatprep.subr.mxu0 0.0
    %579 = vmatpush1.msra.mxu0 0.0
    %580 = vmatprep.mubr.f32.mxu0 0.0
    %581 = vmatmul.mubr.f32.gmra.mrb[0].mxu0 %v469
    %v582 = vpop.f32.mrb[0].mxu0
    %v583 = vadd.f32 0.0, %v582
    %v584 = vpop.f32.mrb[0].mxu0
    %585 = vmatprep.mubr.f32.mxu0 0.0
    %586 = vmatmul.mubr.f32.gmra.mrb[0].mxu0 %v472
    %v587 = vpop.f32.mrb[0].mxu0
    %v588 = vadd.f32 0.0, %v587
    %v589 = vpop.f32.mrb[0].mxu0
    %590 = vmatprep.mubr.f32.mxu0 0.0
    %591 = vmatmul.mubr.f32.gmra.mrb[0].mxu0 %v475
    %v592 = vpop.f32.mrb[0].mxu0
    %v593 = vadd.f32 0.0, %v592
    %v594 = vpop.f32.mrb[0].mxu0
    %595 = vmatprep.mubr.f32.mxu0 0.0
    %596 = vmatmul.mubr.f32.gmra.mrb[0].mxu0 %v478
    %v597 = vpop.f32.mrb[0].mxu0
    %v598 = vadd.f32 0.0, %v597
    %v599 = vpop.f32.mrb[0].mxu0
    %600 = vmatprep.mubr.f32.mxu0 0.0
    %601 = vmatmul.mubr.f32.gmra.mrb[0].mxu0 %v481
    %v602 = vpop.f32.mrb[0].mxu0
    %v603 = vadd.f32 0.0, %v602
    %v604 = vpop.f32.mrb[0].mxu0
    %605 = vmatprep.mubr.f32.mxu0 0.0
    %606 = vmatmul.mubr.f32.gmra.mrb[0].mxu0 %v484
    %v607 = vpop.f32.mrb[0].mxu0
    %v608 = vadd.f32 0.0, %v607
    %v609 = vpop.f32.mrb[0].mxu0
    %610 = vmatprep.mubr.f32.mxu0 0.0
    %611 = vmatmul.mubr.f32.gmra.mrb[0].mxu0 %v487
    %v612 = vpop.f32.mrb[0].mxu0
    %v613 = vadd.f32 0.0, %v612
    %v614 = vpop.f32.mrb[0].mxu0
    %615 = vmatprep.mubr.f32.mxu0 0.0
    %616 = vmatmul.mubr.f32.gmra.mrb[0].mxu0 %v490
    %v617 = vpop.f32.mrb[0].mxu0
    %v618 = vadd.f32 0.0, %v617
    %v619 = vpop.f32.mrb[0].mxu0
    %620 = vmatprep.mubr.f32.mxu0 0.0
    %621 = vmatmul.mubr.f32.gmra.mrb[0].mxu0 %v493
    %v622 = vpop.f32.mrb[0].mxu0
    %v623 = vadd.f32 0.0, %v622
    %v624 = vpop.f32.mrb[0].mxu0
    %625 = vmatprep.mubr.f32.mxu0 0.0
    %626 = vmatmul.mubr.f32.gmra.mrb[0].mxu0 %v496
    %v627 = vpop.f32.mrb[0].mxu0
    %v628 = vadd.f32 0.0, %v627
    %v629 = vpop.f32.mrb[0].mxu0
    %630 = vmatprep.mubr.f32.mxu0 0.0
    %631 = vmatmul.mubr.f32.gmra.mrb[0].mxu0 %v499
    %v632 = vpop.f32.mrb[0].mxu0
    %v633 = vadd.f32 0.0, %v632
    %v634 = vpop.f32.mrb[0].mxu0
    %635 = vmatprep.mubr.f32.mxu0 0.0
    %636 = vmatmul.mubr.f32.gmra.mrb[0].mxu0 %v502
    %v637 = vpop.f32.mrb[0].mxu0
    %v638 = vadd.f32 0.0, %v637
    %v639 = vpop.f32.mrb[0].mxu0
    %640 = vmatprep.mubr.f32.mxu0 0.0
    %641 = vmatmul.mubr.f32.gmra.mrb[0].mxu0 %v505
    %v642 = vpop.f32.mrb[0].mxu0
    %v643 = vadd.f32 0.0, %v642
    %v644 = vpop.f32.mrb[0].mxu0
    %645 = vmatprep.mubr.f32.mxu0 0.0
    %646 = vmatmul.mubr.f32.gmra.mrb[0].mxu0 %v508
    %v647 = vpop.f32.mrb[0].mxu0
    %v648 = vadd.f32 0.0, %v647
    %v649 = vpop.f32.mrb[0].mxu0
    %650 = vmatprep.mubr.f32.mxu0 0.0
    %651 = vmatmul.mubr.f32.gmra.mrb[0].mxu0 %v511
    %v652 = vpop.f32.mrb[0].mxu0
    %v653 = vadd.f32 0.0, %v652
    %v654 = vpop.f32.mrb[0].mxu0
    %655 = vmatprep.mubr.f32.mxu0 0.0
    %656 = vmatmul.mubr.f32.gmra.mrb[0].mxu0 %v514
    %v657 = vpop.f32.mrb[0].mxu0
    %v658 = vadd.f32 0.0, %v657
    %v659 = vpop.f32.mrb[0].mxu0
    %660 = vdwg.mxu0
    %v662 = vsel %vm46, %v28, 0
    %v665 = vsel %vm46, %v29, 0
    %v668 = vsel %vm46, %v30, 0
    %v671 = vsel %vm46, %v31, 0
    %v674 = vsel %vm46, %v32, 0
    %v677 = vsel %vm46, %v33, 0
    %v680 = vsel %vm46, %v34, 0
    %v683 = vsel %vm46, %v35, 0
    %v686 = vsel %vm46, %v36, 0
    %v689 = vsel %vm46, %v37, 0
    %v692 = vsel %vm46, %v38, 0
    %v695 = vsel %vm46, %v39, 0
    %v698 = vsel %vm46, %v40, 0
    %v701 = vsel %vm46, %v41, 0
    %v704 = vsel %vm46, %v42, 0
    %v707 = vsel %vm46, %v43, 0
    %709 = vmatprep.subr.mxu0 0.0
    %710 = vmatpush1.msra.mxu0 %v464
    %711 = vmatprep.subr.mxu0 0.0
    %712 = vmatpush1.msra.mxu0 %v465
    %713 = vmatprep.subr.mxu0 0.0
    %714 = vmatpush1.msra.mxu0 %v466
    %715 = vmatprep.subr.mxu0 0.0
    %716 = vmatpush1.msra.mxu0 %v467
    %717 = vmatprep.subr.mxu0 0.0
    %718 = vmatpush1.msra.mxu0 0.0
    %719 = vmatprep.subr.mxu0 0.0
    %720 = vmatpush1.msra.mxu0 0.0
    %721 = vmatprep.subr.mxu0 0.0
    %722 = vmatpush1.msra.mxu0 0.0
    %723 = vmatprep.subr.mxu0 0.0
    %724 = vmatpush1.msra.mxu0 0.0
    %725 = vmatprep.subr.mxu0 0.0
    %726 = vmatpush1.msra.mxu0 0.0
    %727 = vmatprep.subr.mxu0 0.0
    %728 = vmatpush1.msra.mxu0 0.0
    %729 = vmatprep.subr.mxu0 0.0
    %730 = vmatpush1.msra.mxu0 0.0
    %731 = vmatprep.subr.mxu0 0.0
    %732 = vmatpush1.msra.mxu0 0.0
    %733 = vmatprep.subr.mxu0 0.0
    %734 = vmatpush1.msra.mxu0 0.0
    %735 = vmatprep.subr.mxu0 0.0
    %736 = vmatpush1.msra.mxu0 0.0
    %737 = vmatprep.subr.mxu0 0.0
    %738 = vmatpush1.msra.mxu0 0.0
    %739 = vmatprep.subr.mxu0 0.0
    %740 = vmatpush1.msra.mxu0 0.0
    %741 = vmatprep.subr.mxu0 0.0
    %742 = vmatpush1.msra.mxu0 0.0
    %743 = vmatprep.subr.mxu0 0.0
    %744 = vmatpush1.msra.mxu0 0.0
    %745 = vmatprep.subr.mxu0 0.0
    %746 = vmatpush1.msra.mxu0 0.0
    %747 = vmatprep.subr.mxu0 0.0
    %748 = vmatpush1.msra.mxu0 0.0
    %749 = vmatprep.subr.mxu0 0.0
    %750 = vmatpush1.msra.mxu0 0.0
    %751 = vmatprep.subr.mxu0 0.0
    %752 = vmatpush1.msra.mxu0 0.0
    %753 = vmatprep.subr.mxu0 0.0
    %754 = vmatpush1.msra.mxu0 0.0
    %755 = vmatprep.subr.mxu0 0.0
    %756 = vmatpush1.msra.mxu0 0.0
    %757 = vmatprep.subr.mxu0 0.0
    %758 = vmatpush1.msra.mxu0 0.0
    %759 = vmatprep.subr.mxu0 0.0
    %760 = vmatpush1.msra.mxu0 0.0
    %761 = vmatprep.subr.mxu0 0.0
    %762 = vmatpush1.msra.mxu0 0.0
    %763 = vmatprep.subr.mxu0 0.0
    %764 = vmatpush1.msra.mxu0 0.0
    %765 = vmatprep.subr.mxu0 0.0
    %766 = vmatpush1.msra.mxu0 0.0
    %767 = vmatprep.subr.mxu0 0.0
    %768 = vmatpush1.msra.mxu0 0.0
    %769 = vmatprep.subr.mxu0 0.0
    %770 = vmatpush1.msra.mxu0 0.0
    %771 = vmatprep.subr.mxu0 0.0
    %772 = vmatpush1.msra.mxu0 0.0
    %773 = vmatprep.mubr.f32.mxu0 0.0
    %774 = vmatmul.mubr.f32.gmra.mrb[0].mxu0 %v662
    %v775 = vpop.f32.mrb[0].mxu0
    %v776 = vadd.f32 0.0, %v775
    %v777 = vpop.f32.mrb[0].mxu0
    %778 = vmatprep.mubr.f32.mxu0 0.0
    %779 = vmatmul.mubr.f32.gmra.mrb[0].mxu0 %v665
    %v780 = vpop.f32.mrb[0].mxu0
    %v781 = vadd.f32 0.0, %v780
    %v782 = vpop.f32.mrb[0].mxu0
    %783 = vmatprep.mubr.f32.mxu0 0.0
    %784 = vmatmul.mubr.f32.gmra.mrb[0].mxu0 %v668
    %v785 = vpop.f32.mrb[0].mxu0
    %v786 = vadd.f32 0.0, %v785
    %v787 = vpop.f32.mrb[0].mxu0
    %788 = vmatprep.mubr.f32.mxu0 0.0
    %789 = vmatmul.mubr.f32.gmra.mrb[0].mxu0 %v671
    %v790 = vpop.f32.mrb[0].mxu0
    %v791 = vadd.f32 0.0, %v790
    %v792 = vpop.f32.mrb[0].mxu0
    %793 = vmatprep.mubr.f32.mxu0 0.0
    %794 = vmatmul.mubr.f32.gmra.mrb[0].mxu0 %v674
    %v795 = vpop.f32.mrb[0].mxu0
    %v796 = vadd.f32 0.0, %v795
    %v797 = vpop.f32.mrb[0].mxu0
    %798 = vmatprep.mubr.f32.mxu0 0.0
    %799 = vmatmul.mubr.f32.gmra.mrb[0].mxu0 %v677
    %v800 = vpop.f32.mrb[0].mxu0
    %v801 = vadd.f32 0.0, %v800
    %v802 = vpop.f32.mrb[0].mxu0
    %803 = vmatprep.mubr.f32.mxu0 0.0
    %804 = vmatmul.mubr.f32.gmra.mrb[0].mxu0 %v680
    %v805 = vpop.f32.mrb[0].mxu0
    %v806 = vadd.f32 0.0, %v805
    %v807 = vpop.f32.mrb[0].mxu0
    %808 = vmatprep.mubr.f32.mxu0 0.0
    %809 = vmatmul.mubr.f32.gmra.mrb[0].mxu0 %v683
    %v810 = vpop.f32.mrb[0].mxu0
    %v811 = vadd.f32 0.0, %v810
    %v812 = vpop.f32.mrb[0].mxu0
    %813 = vmatprep.mubr.f32.mxu0 0.0
    %814 = vmatmul.mubr.f32.gmra.mrb[0].mxu0 %v686
    %v815 = vpop.f32.mrb[0].mxu0
    %v816 = vadd.f32 0.0, %v815
    %v817 = vpop.f32.mrb[0].mxu0
    %818 = vmatprep.mubr.f32.mxu0 0.0
    %819 = vmatmul.mubr.f32.gmra.mrb[0].mxu0 %v689
    %v820 = vpop.f32.mrb[0].mxu0
    %v821 = vadd.f32 0.0, %v820
    %v822 = vpop.f32.mrb[0].mxu0
    %823 = vmatprep.mubr.f32.mxu0 0.0
    %824 = vmatmul.mubr.f32.gmra.mrb[0].mxu0 %v692
    %v825 = vpop.f32.mrb[0].mxu0
    %v826 = vadd.f32 0.0, %v825
    %v827 = vpop.f32.mrb[0].mxu0
    %828 = vmatprep.mubr.f32.mxu0 0.0
    %829 = vmatmul.mubr.f32.gmra.mrb[0].mxu0 %v695
    %v830 = vpop.f32.mrb[0].mxu0
    %v831 = vadd.f32 0.0, %v830
    %v832 = vpop.f32.mrb[0].mxu0
    %833 = vmatprep.mubr.f32.mxu0 0.0
    %834 = vmatmul.mubr.f32.gmra.mrb[0].mxu0 %v698
    %v835 = vpop.f32.mrb[0].mxu0
    %v836 = vadd.f32 0.0, %v835
    %v837 = vpop.f32.mrb[0].mxu0
    %838 = vmatprep.mubr.f32.mxu0 0.0
    %839 = vmatmul.mubr.f32.gmra.mrb[0].mxu0 %v701
    %v840 = vpop.f32.mrb[0].mxu0
    %v841 = vadd.f32 0.0, %v840
    %v842 = vpop.f32.mrb[0].mxu0
    %843 = vmatprep.mubr.f32.mxu0 0.0
    %844 = vmatmul.mubr.f32.gmra.mrb[0].mxu0 %v704
    %v845 = vpop.f32.mrb[0].mxu0
    %v846 = vadd.f32 0.0, %v845
    %v847 = vpop.f32.mrb[0].mxu0
    %848 = vmatprep.mubr.f32.mxu0 0.0
    %849 = vmatmul.mubr.f32.gmra.mrb[0].mxu0 %v707
    %v850 = vpop.f32.mrb[0].mxu0
    %v851 = vadd.f32 0.0, %v850
    %v852 = vpop.f32.mrb[0].mxu0
    %853 = vdwg.mxu0
    %v854 = vsub.f32 %v399, %v583
    %v855 = vsub.f32 %v400, %v588
    %v856 = vsub.f32 %v401, %v593
    %v857 = vsub.f32 %v402, %v598
    %v858 = vsub.f32 %v403, %v603
    %v859 = vsub.f32 %v404, %v608
    %v860 = vsub.f32 %v405, %v613
    %v861 = vsub.f32 %v406, %v618
    %v862 = vsub.f32 %v407, %v623
    %v863 = vsub.f32 %v408, %v628
    %v864 = vsub.f32 %v409, %v633
    %v865 = vsub.f32 %v410, %v638
    %v866 = vsub.f32 %v411, %v643
    %v867 = vsub.f32 %v412, %v648
    %v868 = vsub.f32 %v413, %v653
    %v869 = vsub.f32 %v414, %v658
    %v870 = vsub.f32 %v415, %v776
    %v871 = vsub.f32 %v416, %v781
    %v872 = vsub.f32 %v417, %v786
    %v873 = vsub.f32 %v418, %v791
    %v874 = vsub.f32 %v419, %v796
    %v875 = vsub.f32 %v420, %v801
    %v876 = vsub.f32 %v421, %v806
    %v877 = vsub.f32 %v422, %v811
    %v878 = vsub.f32 %v423, %v816
    %v879 = vsub.f32 %v424, %v821
    %v880 = vsub.f32 %v425, %v826
    %v881 = vsub.f32 %v426, %v831
    %v882 = vsub.f32 %v427, %v836
    %v883 = vsub.f32 %v428, %v841
    %v884 = vsub.f32 %v429, %v846
    %v885 = vsub.f32 %v430, %v851
    %886 = vst [vmem:[#allocation2] sm:$0xff] %v854
    %887 = vst [vmem:[#allocation2 + $0x8] sm:$0xff] %v855
    %888 = vst [vmem:[#allocation2 + $0x10] sm:$0xff] %v856
    %889 = vst [vmem:[#allocation2 + $0x18] sm:$0xff] %v857
    %890 = vst [vmem:[#allocation2 + $0x20] sm:$0xff] %v858
    %891 = vst [vmem:[#allocation2 + $0x28] sm:$0xff] %v859
    %892 = vst [vmem:[#allocation2 + $0x30] sm:$0xff] %v860
    %893 = vst [vmem:[#allocation2 + $0x38] sm:$0xff] %v861
    %894 = vst [vmem:[#allocation2 + $0x40] sm:$0xff] %v862
    %895 = vst [vmem:[#allocation2 + $0x48] sm:$0xff] %v863
    %896 = vst [vmem:[#allocation2 + $0x50] sm:$0xff] %v864
    %897 = vst [vmem:[#allocation2 + $0x58] sm:$0xff] %v865
    %898 = vst [vmem:[#allocation2 + $0x60] sm:$0xff] %v866
    %899 = vst [vmem:[#allocation2 + $0x68] sm:$0xff] %v867
    %900 = vst [vmem:[#allocation2 + $0x70] sm:$0xff] %v868
    %901 = vst [vmem:[#allocation2 + $0x78] sm:$0xff] %v869
    %902 = vst [vmem:[#allocation2 + $0x80] sm:$0xff] %v870
    %903 = vst [vmem:[#allocation2 + $0x88] sm:$0xff] %v871
    %904 = vst [vmem:[#allocation2 + $0x90] sm:$0xff] %v872
    %905 = vst [vmem:[#allocation2 + $0x98] sm:$0xff] %v873
    %906 = vst [vmem:[#allocation2 + $0xa0] sm:$0xff] %v874
    %907 = vst [vmem:[#allocation2 + $0xa8] sm:$0xff] %v875
    %908 = vst [vmem:[#allocation2 + $0xb0] sm:$0xff] %v876
    %909 = vst [vmem:[#allocation2 + $0xb8] sm:$0xff] %v877
    %910 = vst [vmem:[#allocation2 + $0xc0] sm:$0xff] %v878
    %911 = vst [vmem:[#allocation2 + $0xc8] sm:$0xff] %v879
    %912 = vst [vmem:[#allocation2 + $0xd0] sm:$0xff] %v880
    %913 = vst [vmem:[#allocation2 + $0xd8] sm:$0xff] %v881
    %914 = vst [vmem:[#allocation2 + $0xe0] sm:$0xff] %v882
    %915 = vst [vmem:[#allocation2 + $0xe8] sm:$0xff] %v883
    %916 = vst [vmem:[#allocation2 + $0xf0] sm:$0xff] %v884
    %917 = vst [vmem:[#allocation2 + $0xf8] sm:$0xff] %v885
    // Predicated region
    $region10: #{tpu_custom_call.1} parent=1 // pred_check
      _
    $region11: #{tpu_custom_call.1} parent=1 // pred_check_branch
      %919 = sbr.rel (0) target = $region13
    $region12: #{tpu_custom_call.1} parent=1 // pred_region
      %s921 = ssub.s32 4096, 4096
      %922 = vsyncadd [#allocation3], %s921
      %s923 = sshll.u32 [#allocation2], 4
      %s924 = int_to_ptr.vmem [resolvable:$true] %s923
      %929 = dma.vmem_to_hbm [thread:$0]  %s924, 4096, %s2, [#allocation3], 128, 128, 8
    $region13: #{tpu_custom_call.1} parent=1 // pred_fallthru
      _
    // Predicated region
    $region14: #{tpu_custom_call.1} parent=1 // pred_check
      _
    $region15: #{tpu_custom_call.1} parent=1 // pred_check_branch
      %931 = sbr.rel (0) target = $region17
    $region16: #{tpu_custom_call.1} parent=1 // pred_region
      %932 = dma.done [#allocation3], 4096
    $region17: #{tpu_custom_call.1} parent=1 // pred_fallthru
      _
    %933 = vsyncpa [#allocation3], 1

</llo_original>
